<compile_context>
chip_gen: v7x
topology: tpu7x:2x2x1
jax: 0.10.0
libtpu: 0.0.40
codegen_flags: <defaults>
</compile_context>

<pallas_src>
import functools
import math

import jax
import jax.numpy as jnp
from jax import lax
from jax.experimental import pallas as pl
from jax.experimental.pallas import tpu as pltpu


# --------------------- Kernel 1: fused qkv 1x1-conv projection ---------------

def _qkv_proj_kernel(x_ref, wqkv_ref, q_ref, k_ref, v_ref, *, num_heads, scale):
    """One (batch, n-tile) step: qkv^T = Wqkv @ x^T, per-head split, q scaled."""
    C = x_ref.shape[1]
    tn = x_ref.shape[2]
    hd = C // num_heads
    # Cast x to the MXU dtype INSIDE the kernel (review: avoids a separate
    # XLA f32->bf16 HBM pass over x).
    xt = x_ref[0].astype(wqkv_ref.dtype)                          # (C, tn)
    qkvt = jnp.dot(wqkv_ref[...], xt,
                   preferred_element_type=jnp.float32)            # (3C, tn) f32
    # Static, 8-row-aligned sublane slices of the f32 slab; the reshapes split
    # the sublane axis on f32 data only (hd = multiple of 8 -> free relabel),
    # then cast to the bf16 storage dtype.  Softmax scale is folded into q.
    q = (qkvt[0 * C:1 * C] * scale).reshape(num_heads, hd, tn)
    k = qkvt[1 * C:2 * C].reshape(num_heads, hd, tn)
    v = qkvt[2 * C:3 * C].reshape(num_heads, hd, tn)
    q_ref[0] = q.astype(q_ref.dtype)
    k_ref[0] = k.astype(k_ref.dtype)
    v_ref[0] = v.astype(v_ref.dtype)


# --------- Kernel 2: flash-style attention + fused output projection ---------

def _flash_attn_proj_kernel(q_ref, k_ref, v_ref, wp_ref, bp_ref, o_ref,
                            m_sc, l_sc, acc_sc, *, approx_recip):
    """Grid = (batch, q_tile, kv_tile); kv is the innermost reduction axis.

    q_ref/k_ref/v_ref: (1, heads, hd, T) bf16, channel-major (q pre-scaled).
    Scores are kept transposed, s^T = K^T Q of shape (heads, TK, TQ), so that
    the running max / sum / accumulator all live lane-major ((heads, 1, TQ) and
    (heads, hd, TQ)) and the finalize reshape (heads, hd, TQ) -> (C, TQ) feeds
    the single Wp(C,C) @ O^T(C,TQ) projection matmul directly.
    """
    ki = pl.program_id(2)
    nk = pl.num_programs(2)

    @pl.when(ki == 0)
    def _init():
        m_sc[...] = jnp.full_like(m_sc, -jnp.inf)
        l_sc[...] = jnp.zeros_like(l_sc)
        acc_sc[...] = jnp.zeros_like(acc_sc)

    qt = q_ref[0]                                   # (heads, hd, TQ), scaled
    kt = k_ref[0]                                   # (heads, hd, TK)
    vt = v_ref[0]                                   # (heads, hd, TK)

    # s^T[h, j, i] = sum_d k[h, d, j] * q[h, d, i]   -> (heads, TK, TQ), f32
    st = lax.dot_general(kt, qt, (((1,), (1,)), ((0,), (0,))),
                         preferred_element_type=jnp.float32)

    m_prev = m_sc[...]                              # (heads, 1, TQ)
    m_cur = jnp.max(st, axis=1, keepdims=True)      # reduce over keys (sublane)
    m_new = jnp.maximum(m_prev, m_cur)
    alpha = jnp.exp(m_prev - m_new)                 # rescale of old stats
    p = jnp.exp(st - m_new)                         # (heads, TK, TQ) f32
    l_sc[...] = alpha * l_sc[...] + jnp.sum(p, axis=1, keepdims=True)

    # O^T update: acc[h, d, i] += sum_j v[h, d, j] * p[h, j, i]
    pv = lax.dot_general(vt, p.astype(vt.dtype), (((2,), (1,)), ((0,), (0,))),
                         preferred_element_type=jnp.float32)   # (heads, hd, TQ)
    acc_sc[...] = alpha * acc_sc[...] + pv
    m_sc[...] = m_new

    @pl.when(ki == nk - 1)
    def _finalize():
        if approx_recip:
            inv_l = pl.reciprocal(l_sc[...], approx=True)      # EUP slot
        else:
            inv_l = 1.0 / l_sc[...]
        ot = acc_sc[...] * inv_l                               # (heads, hd, TQ) f32
        c_dim = ot.shape[0] * ot.shape[1]
        ot = ot.reshape(c_dim, ot.shape[2])                    # (C, TQ), free in f32
        out = jnp.dot(wp_ref[...], ot.astype(wp_ref.dtype),
                      preferred_element_type=jnp.float32) + bp_ref[...]
        o_ref[0] = out.astype(o_ref.dtype)                     # lane-dense store


# --------------------------------- Wrapper -----------------------------------

def _pick_tile(n, preferred):
    return preferred if (n % preferred == 0) else n


def global_attention(x_nchw, w_qkv, w_proj, b_proj, num_heads, *,
                     use_bf16=True, q_tile=128, kv_tile=128, n_tile=512):
    """GlobalAttention forward (HSCATB.attn.global_attn).

    x_nchw: (B, C, H, W);  w_qkv: (3C, C);  w_proj: (C, C);  b_proj: (C,).
    Weights are in PyTorch Conv2d(kernel_size=1) layout (out_ch, in_ch).
    use_bf16: bf16 MXU inputs + approx EUP reciprocal (bf16-level accuracy);
              False = exact f32 everywhere (slower MXU regime).
    """
    B, C, H, W = x_nchw.shape
    N = H * W
    assert C % num_heads == 0, "C must be divisible by num_heads"
    hd = C // num_heads
    assert hd % 8 == 0, "head_dim must be a multiple of 8 (f32 sublane tile)"
    scale = hd ** (-0.5)

    mxu_dtype = jnp.bfloat16 if use_bf16 else jnp.float32
    itemsize = 2 if use_bf16 else 4

    n_tile = _pick_tile(N, min(n_tile, N))
    q_tile = _pick_tile(N, min(q_tile, N))
    kv_tile = _pick_tile(N, min(kv_tile, N))
    num_q = N // q_tile
    num_kv = N // kv_tile

    # NCHW -> (B, C, N) is a pure reshape (channel-major kept end to end):
    # no transpose and NO dtype cast of x in the wrapper.
    x_cn = x_nchw.reshape(B, C, N)
    w_qkv_m = w_qkv.astype(mxu_dtype)                          # (3C, C), tiny cast
    w_proj_m = w_proj.astype(mxu_dtype)                        # (C, C)
    b_col = b_proj.reshape(C, 1).astype(jnp.float32)

    x_bytes = int(x_nchw.dtype.itemsize)
    out_bytes = int(x_nchw.dtype.itemsize)

    # ---- pass 1: fused qkv projection -> (B, heads, hd, N) bf16 q/k/v -------
    qkv_cost = pl.CostEstimate(
        flops=int(2 * B * (3 * C) * C * N),
        transcendentals=0,
        bytes_accessed=int(B * C * N * x_bytes + 3 * C * C * itemsize
                           + 3 * B * C * N * itemsize))
    q_hm, k_hm, v_hm = pl.pallas_call(
        functools.partial(_qkv_proj_kernel, num_heads=num_heads, scale=scale),
        out_shape=tuple(jax.ShapeDtypeStruct((B, num_heads, hd, N), mxu_dtype)
                        for _ in range(3)),
        grid_spec=pltpu.PrefetchScalarGridSpec(
            num_scalar_prefetch=0,
            grid=(B, N // n_tile),
            in_specs=[
                pl.BlockSpec((1, C, n_tile), lambda b, n: (b, 0, n)),
                pl.BlockSpec((3 * C, C), lambda b, n: (0, 0)),
            ],
            out_specs=[
                pl.BlockSpec((1, num_heads, hd, n_tile), lambda b, n: (b, 0, 0, n)),
                pl.BlockSpec((1, num_heads, hd, n_tile), lambda b, n: (b, 0, 0, n)),
                pl.BlockSpec((1, num_heads, hd, n_tile), lambda b, n: (b, 0, 0, n)),
            ],
        ),
        compiler_params=pltpu.CompilerParams(
            dimension_semantics=("parallel", "parallel"),
            vmem_limit_bytes=32 * 1024 * 1024),
        cost_estimate=qkv_cost,
    )(x_cn, w_qkv_m)

    # ---- pass 2: flash attention + fused output projection ------------------
    attn_cost = pl.CostEstimate(
        flops=int(4 * B * num_heads * N * N * hd + 2 * B * C * C * N),
        transcendentals=int(B * num_heads * N * N),
        bytes_accessed=int(B * C * N * itemsize                # q
                           + 2 * num_q * B * C * N * itemsize  # k, v per q-tile
                           + B * C * N * out_bytes             # output
                           + C * C * itemsize + C * 4))        # Wp + bias
    out_cn = pl.pallas_call(
        functools.partial(_flash_attn_proj_kernel, approx_recip=use_bf16),
        out_shape=jax.ShapeDtypeStruct((B, C, N), x_nchw.dtype),
        grid_spec=pltpu.PrefetchScalarGridSpec(
            num_scalar_prefetch=0,
            grid=(B, num_q, num_kv),
            in_specs=[
                pl.BlockSpec((1, num_heads, hd, q_tile),
                             lambda b, qi, ki: (b, 0, 0, qi)),
                pl.BlockSpec((1, num_heads, hd, kv_tile),
                             lambda b, qi, ki: (b, 0, 0, ki)),
                pl.BlockSpec((1, num_heads, hd, kv_tile),
                             lambda b, qi, ki: (b, 0, 0, ki)),
                pl.BlockSpec((C, C), lambda b, qi, ki: (0, 0)),
                pl.BlockSpec((C, 1), lambda b, qi, ki: (0, 0)),
            ],
            out_specs=pl.BlockSpec((1, C, q_tile), lambda b, qi, ki: (b, 0, qi)),
            scratch_shapes=[
                pltpu.VMEM((num_heads, 1, q_tile), jnp.float32),    # running max
                pltpu.VMEM((num_heads, 1, q_tile), jnp.float32),    # running sum
                pltpu.VMEM((num_heads, hd, q_tile), jnp.float32),   # O^T accumulator
            ],
        ),
        compiler_params=pltpu.CompilerParams(
            dimension_semantics=("parallel", "parallel", "arbitrary"),
            vmem_limit_bytes=32 * 1024 * 1024),
        cost_estimate=attn_cost,
    )(q_hm, k_hm, v_hm, w_proj_m, b_col)

    return out_cn.reshape(B, C, H, W)


# ------------------------------- Reference -----------------------------------

def _reference(x_nchw, w_qkv, w_proj, b_proj, num_heads):
    """Pure-JAX f32 reference mirroring the PyTorch GlobalAttention.forward."""
    B, C, H, W = x_nchw.shape
    N = H * W
    hd = C // num_heads
    scale = hd ** (-0.5)
    x = x_nchw.reshape(B, C, N)                                   # (B, C, N)
    qkv = jnp.einsum('oc,bcn->bon', w_qkv, x)                     # (B, 3C, N)
    q, k, v = jnp.split(qkv, 3, axis=1)
    q = q.reshape(B, num_heads, hd, N).transpose(0, 1, 3, 2)      # (B,h,N,hd)
    k = k.reshape(B, num_heads, hd, N)                            # (B,h,hd,N)
    v = v.reshape(B, num_heads, hd, N).transpose(0, 1, 3, 2)      # (B,h,N,hd)
    attn = jnp.einsum('bhnd,bhdm->bhnm', q, k) * scale
    attn = jax.nn.softmax(attn, axis=-1)
    o = jnp.einsum('bhnm,bhmd->bhnd', attn, v)                    # (B,h,N,hd)
    o = o.transpose(0, 1, 3, 2).reshape(B, C, N)                  # (B,C,N)
    o = jnp.einsum('oc,bcn->bon', w_proj, o) + b_proj[None, :, None]
    return o.reshape(B, C, H, W)


if __name__ == "__main__":
    # Small shapes consistent with the module defaults (num_heads=8 -> hd=8),
    # N = H*W = 256 so q/kv tiles of 128 exercise the flash accumulation
    # (2 kv steps) and the lane-dense output path.
    B, C, H, W = 2, 64, 16, 16
    num_heads = 8

    key = jax.random.PRNGKey(0)
    kx, kqkv, kp, kb = jax.random.split(key, 4)

    x = jax.random.normal(kx, (B, C, H, W), dtype=jnp.float32)
    # Conv2d(1x1) weight layouts: (out_ch, in_ch)
    w_qkv = jax.random.normal(kqkv, (3 * C, C), dtype=jnp.float32) / math.sqrt(C)
    w_proj = jax.random.normal(kp, (C, C), dtype=jnp.float32) / math.sqrt(C)
    b_proj = jax.random.normal(kb, (C,), dtype=jnp.float32) * 0.1

    out = global_attention(x, w_qkv, w_proj, b_proj, num_heads)
    out = jax.block_until_ready(out)

    ref = _reference(x, w_qkv, w_proj, b_proj, num_heads)
    assert out.shape == (B, C, H, W)
    # bf16 MXU inputs / f32 accumulation => bf16-level tolerance vs f32 reference.
    assert jnp.allclose(out, ref, atol=5e-2, rtol=5e-2), "mismatch vs reference"

    print("KERNEL_OK")
</pallas_src>

<mosaic_0001>
module attributes {stable_mosaic.version = 11 : i64} {
  func.func @_qkv_proj_kernel(%arg0: i32, %arg1: i32, %arg2: memref<1x64x256xf32, #tpu.memory_space<vmem>>, %arg3: memref<192x64xbf16, #tpu.memory_space<vmem>>, %arg4: memref<1x8x8x256xbf16, #tpu.memory_space<vmem>>, %arg5: memref<1x8x8x256xbf16, #tpu.memory_space<vmem>>, %arg6: memref<1x8x8x256xbf16, #tpu.memory_space<vmem>>) attributes {dimension_semantics = [#tpu.dimension_semantics<parallel>, #tpu.dimension_semantics<parallel>], iteration_bounds = array<i64: 2, 1>, scalar_prefetch = 0 : i64, scratch_operands = 0 : i64, tpu.core_type = #tpu.core_type<tc>, window_params = [{transform_indices = @transform_0, window_bounds = array<i64: 1, 64, 256>}, {pipeline_mode = #tpu.pipeline_mode<synchronous>, transform_indices = @transform_1, window_bounds = array<i64: 192, 64>}, {transform_indices = @transform_2, window_bounds = array<i64: 1, 8, 8, 256>}, {transform_indices = @transform_3, window_bounds = array<i64: 1, 8, 8, 256>}, {transform_indices = @transform_4, window_bounds = array<i64: 1, 8, 8, 256>}]} {
    %c0 = arith.constant 0 : index
    %c0_0 = arith.constant 0 : index
    %c0_1 = arith.constant 0 : index
    %0 = vector.load %arg2[%c0, %c0_0, %c0_1] : memref<1x64x256xf32, #tpu.memory_space<vmem>>, vector<1x64x256xf32>
    %1 = vector.shape_cast %0 : vector<1x64x256xf32> to vector<64x256xf32>
    %2 = arith.truncf %1 : vector<64x256xf32> to vector<64x256xbf16>
    %c0_2 = arith.constant 0 : index
    %c0_3 = arith.constant 0 : index
    %3 = vector.load %arg3[%c0_2, %c0_3] : memref<192x64xbf16, #tpu.memory_space<vmem>>, vector<192x64xbf16>
    %cst = arith.constant dense<0.000000e+00> : vector<192x256xf32>
    %4 = tpu.matmul %3, %2, %cst {dimension_numbers = #tpu.dot_dimension_numbers<[1], [0], [0], [1], [0, 0, 1, 1], [], []>} : vector<192x64xbf16>, vector<64x256xbf16>, vector<192x256xf32> -> vector<192x256xf32>
    %5 = vector.extract_strided_slice %4 {offsets = [0, 0], sizes = [64, 256], strides = [1, 1]} : vector<192x256xf32> to vector<64x256xf32>
    %cst_4 = arith.constant 0.353553385 : f32
    %6 = vector.broadcast %cst_4 : f32 to vector<64x256xf32>
    %7 = arith.mulf %5, %6 : vector<64x256xf32>
    %8 = vector.shape_cast %7 : vector<64x256xf32> to vector<8x8x256xf32>
    %9 = vector.extract_strided_slice %4 {offsets = [64, 0], sizes = [64, 256], strides = [1, 1]} : vector<192x256xf32> to vector<64x256xf32>
    %10 = vector.shape_cast %9 : vector<64x256xf32> to vector<8x8x256xf32>
    %11 = vector.extract_strided_slice %4 {offsets = [128, 0], sizes = [64, 256], strides = [1, 1]} : vector<192x256xf32> to vector<64x256xf32>
    %12 = vector.shape_cast %11 : vector<64x256xf32> to vector<8x8x256xf32>
    %13 = arith.truncf %8 : vector<8x8x256xf32> to vector<8x8x256xbf16>
    %c0_5 = arith.constant 0 : index
    %c0_6 = arith.constant 0 : index
    %c0_7 = arith.constant 0 : index
    %c0_8 = arith.constant 0 : index
    %14 = vector.load %arg4[%c0_5, %c0_6, %c0_7, %c0_8] : memref<1x8x8x256xbf16, #tpu.memory_space<vmem>>, vector<1x8x8x256xbf16>
    %15 = vector.shape_cast %14 : vector<1x8x8x256xbf16> to vector<8x8x256xbf16>
    %16 = vector.shape_cast %13 : vector<8x8x256xbf16> to vector<1x8x8x256xbf16>
    tpu.vector_store %arg4[%c0_5, %c0_6, %c0_7, %c0_8], %16 {strides = array<i32>} : memref<1x8x8x256xbf16, #tpu.memory_space<vmem>>, vector<1x8x8x256xbf16>,
    %17 = arith.truncf %10 : vector<8x8x256xf32> to vector<8x8x256xbf16>
    %c0_9 = arith.constant 0 : index
    %c0_10 = arith.constant 0 : index
    %c0_11 = arith.constant 0 : index
    %c0_12 = arith.constant 0 : index
    %18 = vector.load %arg5[%c0_9, %c0_10, %c0_11, %c0_12] : memref<1x8x8x256xbf16, #tpu.memory_space<vmem>>, vector<1x8x8x256xbf16>
    %19 = vector.shape_cast %18 : vector<1x8x8x256xbf16> to vector<8x8x256xbf16>
    %20 = vector.shape_cast %17 : vector<8x8x256xbf16> to vector<1x8x8x256xbf16>
    tpu.vector_store %arg5[%c0_9, %c0_10, %c0_11, %c0_12], %20 {strides = array<i32>} : memref<1x8x8x256xbf16, #tpu.memory_space<vmem>>, vector<1x8x8x256xbf16>,
    %21 = arith.truncf %12 : vector<8x8x256xf32> to vector<8x8x256xbf16>
    %c0_13 = arith.constant 0 : index
    %c0_14 = arith.constant 0 : index
    %c0_15 = arith.constant 0 : index
    %c0_16 = arith.constant 0 : index
    %22 = vector.load %arg6[%c0_13, %c0_14, %c0_15, %c0_16] : memref<1x8x8x256xbf16, #tpu.memory_space<vmem>>, vector<1x8x8x256xbf16>
    %23 = vector.shape_cast %22 : vector<1x8x8x256xbf16> to vector<8x8x256xbf16>
    %24 = vector.shape_cast %21 : vector<8x8x256xbf16> to vector<1x8x8x256xbf16>
    tpu.vector_store %arg6[%c0_13, %c0_14, %c0_15, %c0_16], %24 {strides = array<i32>} : memref<1x8x8x256xbf16, #tpu.memory_space<vmem>>, vector<1x8x8x256xbf16>,
    return
  }
  func.func @transform_0(%arg0: i32, %arg1: i32) -> (i32, i32, i32) {
    %c0_i32 = arith.constant 0 : i32
    %c0_i32_0 = arith.constant 0 : i32
    return %arg0, %c0_i32, %arg1 : i32, i32, i32
  }
  func.func @transform_1(%arg0: i32, %arg1: i32) -> (i32, i32) {
    %c0_i32 = arith.constant 0 : i32
    %c0_i32_0 = arith.constant 0 : i32
    %c0_i32_1 = arith.constant 0 : i32
    return %c0_i32, %c0_i32_0 : i32, i32
  }
  func.func @transform_2(%arg0: i32, %arg1: i32) -> (i32, i32, i32, i32) {
    %c0_i32 = arith.constant 0 : i32
    %c0_i32_0 = arith.constant 0 : i32
    %c0_i32_1 = arith.constant 0 : i32
    return %arg0, %c0_i32, %c0_i32_0, %arg1 : i32, i32, i32, i32
  }
  func.func @transform_3(%arg0: i32, %arg1: i32) -> (i32, i32, i32, i32) {
    %c0_i32 = arith.constant 0 : i32
    %c0_i32_0 = arith.constant 0 : i32
    %c0_i32_1 = arith.constant 0 : i32
    return %arg0, %c0_i32, %c0_i32_0, %arg1 : i32, i32, i32, i32
  }
  func.func @transform_4(%arg0: i32, %arg1: i32) -> (i32, i32, i32, i32) {
    %c0_i32 = arith.constant 0 : i32
    %c0_i32_0 = arith.constant 0 : i32
    %c0_i32_1 = arith.constant 0 : i32
    return %arg0, %c0_i32, %c0_i32_0, %arg1 : i32, i32, i32, i32
  }
}

</mosaic_0001>

<llo_original>
// kernel: tpu_custom_call.1
$region0: #{tpu_custom_call.1}
  #allocation0 [shape = 'u32[]', space=smem, size = 0x4, offset = 0x4, fixed_abs, tag = 'smem constant byte address 0x4 - core index']
  #allocation1 [shape = 'u32[144,128]{1,0:T(1,128)}', space=vmem, size = 0x12000, scoped, tag = 'internal scratch']
  %s0 = inlined_call_operand.hbm [shape: f32[2,64,256], index: 0, kind: input, shape index: {}]
  %s1 = inlined_call_operand.vmem [shape: bf16[192,64], index: 1, kind: input, shape index: {}]
  %s2 = inlined_call_operand.hbm [shape: bf16[2,8,8,256], index: 2, kind: output, shape index: {0}]
  %s3 = inlined_call_operand.hbm [shape: bf16[2,8,8,256], index: 3, kind: output, shape index: {1}]
  %s4 = inlined_call_operand.hbm [shape: bf16[2,8,8,256], index: 4, kind: output, shape index: {2}]
  %5 = xla_tuple %s2, %s3, %s4
  %s6 = sld [smem:[#allocation0]]
  $region61: #{tpu_custom_call.1} parent=0
    _
  %s8 = ssub.s32 1, %s6
  %s9 = scalar_select 0, %s8, %s6
  $region1: #{tpu_custom_call.1} parent=0
    #allocation2 [shape = 'u8[131072]{0}', space=vmem, size = 0x20000, scoped, tag = 'input window, operand 0']
    #allocation3 [shape = 's32[2]{0}', space=sflag, size = 0x8, scoped, tag = 'scoped memory for tpu_custom_call.1']
    #allocation4 [shape = 's32[2]{0}', space=sflag, size = 0x8, scoped, tag = 'scoped memory for tpu_custom_call.1']
    #allocation5 [shape = 'u8[65536]{0}', space=vmem, size = 0x10000, scoped, tag = 'output window, operand 0']
    #allocation6 [shape = 'u8[65536]{0}', space=vmem, size = 0x10000, scoped, tag = 'output window, operand 1']
    #allocation7 [shape = 's32[2]{0}', space=sflag, size = 0x8, scoped, tag = 'scoped memory for tpu_custom_call.1']
    #allocation8 [shape = 'u8[65536]{0}', space=vmem, size = 0x10000, scoped, tag = 'output window, operand 2']
    %10 = vsyncpa [#allocation3], 0
    %s11 = scalar_lea.sflag [#allocation3], 1
    %12 = vsyncpa %s11, 0
    %13 = vsyncpa [#allocation4], 0
    %s14 = scalar_lea.sflag [#allocation4], 1
    %15 = vsyncpa %s14, 0
    %16 = vsyncpa [#allocation7], 0
    %s17 = scalar_lea.sflag [#allocation7], 1
    %18 = vsyncpa %s17, 0
    loop: start=0, step=1, limit=4
    $region2: #{tpu_custom_call.1} parent=1 // loop_pre_header
      _
    $region3: #{tpu_custom_call.1} parent=1 // loop_header
      %s20 = sphi 0, %s24
      %p21 = scmp.ge.s32.totalorder %s20, 4
      %s27 = sphi 0, %s39
      %s28 = sphi 0, %s35
      %s29 = sphi 0, %s27
      %s30 = sphi 0, %s28
      %s31 = sphi 0, %s29
      %s32 = sphi 0, %s30
      %s44 = sphi 0, %s46
      %s47 = sphi 0, %s44
      %s48 = sphi 0, %s47
      %s64 = sphi 0, %s48
      %s68 = sphi 0, %s68
      %s70 = sphi 0, %s68
      %s71 = sphi 0, %s70
      %s85 = sphi 0, %s71
      %s93 = sphi 0, %s95
      %s96 = sphi 0, %s93
      %s97 = sphi 0, %s96
      %s113 = sphi 0, %s97
      %s121 = sphi 0, %s123
      %s124 = sphi 0, %s121
      %s125 = sphi 0, %s124
      %s141 = sphi 0, %s125
      %s149 = sphi 0, %s151
      %s152 = sphi 0, %s149
      %s153 = sphi 0, %s152
      %s169 = sphi 0, %s153
    $region4: #{tpu_custom_call.1} parent=1 // loop_header_branch
      %23 = sbr.rel (%p21) target = $region8
    $region5: #{tpu_custom_call.1} parent=1 // loop_body
      %s25 = ssub.s32 %s20, 1
      %s26 = ssub.s32 %s20, 2
      %s33 = sadd.s32 1, %s28
      %p34 = scmp.ge.s32.totalorder %s33, 1
      %s35 = scalar_select %p34, 0, %s33
      %s36 = sadd.s32 1, %s27
      %s37 = scalar_select %p34, %s36, %s27
      %p38 = scmp.ge.s32.totalorder %s37, 2
      %s39 = scalar_select %p38, 0, %s37
      %s40 = ssub.s32 %s27, %s39
      %s41 = ssub.s32 %s28, %s35
      %s42 = sor.u32 %s40, %s41
      %p43 = scmp.eq.s32.totalorder %s42, 0
      %s45 = sadd.s32 %s44, 1
      %s46 = scalar_select %p43, %s44, %s45
      %p49 = pneg %p43
      %p50 = scmp.eq.s32.totalorder %s20, 1
      %p51 = por %p49, %p50
      %p52 = scmp.ne.s32.totalorder %s44, %s47
      %p53 = scmp.eq.s32.totalorder %s20, 0
      %p54 = por %p52, %p53
      %p55 = scmp.ne.s32.totalorder %s44, %s47
      %p56 = scmp.eq.s32.totalorder %s25, 1
      %p57 = por %p55, %p56
      %p58 = scmp.ne.s32.totalorder %s47, %s48
      %p59 = scmp.eq.s32.totalorder %s25, 0
      %p60 = por %p58, %p59
      %p61 = scmp.ne.s32.totalorder %s47, %s48
      %p62 = scmp.eq.s32.totalorder %s26, 1
      %p63 = por %p61, %p62
      %p65 = scmp.ne.s32.totalorder %s48, %s64
      %p66 = scmp.eq.s32.totalorder %s26, 0
      %p67 = por %p65, %p66
      %s69 = sadd.s32 %s68, 1
      %p72 = scmp.eq.s32.totalorder %s20, 1
      %p73 = scmp.ne.s32.totalorder %s68, %s70
      %p74 = scmp.eq.s32.totalorder %s20, 0
      %p75 = por %p73, %p74
      %p76 = scmp.ne.s32.totalorder %s68, %s70
      %p77 = scmp.eq.s32.totalorder %s25, 1
      %p78 = por %p76, %p77
      %p79 = scmp.ne.s32.totalorder %s70, %s71
      %p80 = scmp.eq.s32.totalorder %s25, 0
      %p81 = por %p79, %p80
      %p82 = scmp.ne.s32.totalorder %s70, %s71
      %p83 = scmp.eq.s32.totalorder %s26, 1
      %p84 = por %p82, %p83
      %p86 = scmp.ne.s32.totalorder %s71, %s85
      %p87 = scmp.eq.s32.totalorder %s26, 0
      %p88 = por %p86, %p87
      %s89 = ssub.s32 %s27, %s39
      %s90 = ssub.s32 %s28, %s35
      %s91 = sor.u32 %s89, %s90
      %p92 = scmp.eq.s32.totalorder %s91, 0
      %s94 = sadd.s32 %s93, 1
      %s95 = scalar_select %p92, %s93, %s94
      %p98 = pneg %p92
      %p99 = scmp.eq.s32.totalorder %s20, 1
      %p100 = por %p98, %p99
      %p101 = scmp.ne.s32.totalorder %s93, %s96
      %p102 = scmp.eq.s32.totalorder %s20, 0
      %p103 = por %p101, %p102
      %p104 = scmp.ne.s32.totalorder %s93, %s96
      %p105 = scmp.eq.s32.totalorder %s25, 1
      %p106 = por %p104, %p105
      %p107 = scmp.ne.s32.totalorder %s96, %s97
      %p108 = scmp.eq.s32.totalorder %s25, 0
      %p109 = por %p107, %p108
      %p110 = scmp.ne.s32.totalorder %s96, %s97
      %p111 = scmp.eq.s32.totalorder %s26, 1
      %p112 = por %p110, %p111
      %p114 = scmp.ne.s32.totalorder %s97, %s113
      %p115 = scmp.eq.s32.totalorder %s26, 0
      %p116 = por %p114, %p115
      %s117 = ssub.s32 %s27, %s39
      %s118 = ssub.s32 %s28, %s35
      %s119 = sor.u32 %s117, %s118
      %p120 = scmp.eq.s32.totalorder %s119, 0
      %s122 = sadd.s32 %s121, 1
      %s123 = scalar_select %p120, %s121, %s122
      %p126 = pneg %p120
      %p127 = scmp.eq.s32.totalorder %s20, 1
      %p128 = por %p126, %p127
      %p129 = scmp.ne.s32.totalorder %s121, %s124
      %p130 = scmp.eq.s32.totalorder %s20, 0
      %p131 = por %p129, %p130
      %p132 = scmp.ne.s32.totalorder %s121, %s124
      %p133 = scmp.eq.s32.totalorder %s25, 1
      %p134 = por %p132, %p133
      %p135 = scmp.ne.s32.totalorder %s124, %s125
      %p136 = scmp.eq.s32.totalorder %s25, 0
      %p137 = por %p135, %p136
      %p138 = scmp.ne.s32.totalorder %s124, %s125
      %p139 = scmp.eq.s32.totalorder %s26, 1
      %p140 = por %p138, %p139
      %p142 = scmp.ne.s32.totalorder %s125, %s141
      %p143 = scmp.eq.s32.totalorder %s26, 0
      %p144 = por %p142, %p143
      %s145 = ssub.s32 %s27, %s39
      %s146 = ssub.s32 %s28, %s35
      %s147 = sor.u32 %s145, %s146
      %p148 = scmp.eq.s32.totalorder %s147, 0
      %s150 = sadd.s32 %s149, 1
      %s151 = scalar_select %p148, %s149, %s150
      %p154 = pneg %p148
      %p155 = scmp.eq.s32.totalorder %s20, 1
      %p156 = por %p154, %p155
      %p157 = scmp.ne.s32.totalorder %s149, %s152
      %p158 = scmp.eq.s32.totalorder %s20, 0
      %p159 = por %p157, %p158
      %p160 = scmp.ne.s32.totalorder %s149, %s152
      %p161 = scmp.eq.s32.totalorder %s25, 1
      %p162 = por %p160, %p161
      %p163 = scmp.ne.s32.totalorder %s152, %s153
      %p164 = scmp.eq.s32.totalorder %s25, 0
      %p165 = por %p163, %p164
      %p166 = scmp.ne.s32.totalorder %s152, %s153
      %p167 = scmp.eq.s32.totalorder %s26, 1
      %p168 = por %p166, %p167
      %p170 = scmp.ne.s32.totalorder %s153, %s169
      %p171 = scmp.eq.s32.totalorder %s26, 0
      %p172 = por %p170, %p171
      %p173 = scmp.le.s32.totalorder 1, %s20
      %p174 = scmp.lt.s32.totalorder %s20, 3
      %p175 = pnand %p173, %p174
      %p176 = pneg %p175
      // Predicated region
      $region9: #{tpu_custom_call.1} parent=5 // pred_check
        _
      $region10: #{tpu_custom_call.1} parent=5 // pred_check_branch
        %178 = sbr.rel (%p175) target = $region12
      $region11: #{tpu_custom_call.1} parent=5 // pred_region
        %s179 = ssub.s32 %s20, 1
        // Predicated region
        $region13: #{tpu_custom_call.1} parent=11 // pred_check
          %p180 = pneg %p81
        $region14: #{tpu_custom_call.1} parent=11 // pred_check_branch
          %182 = sbr.rel (%p180) target = $region16
        $region15: #{tpu_custom_call.1} parent=11 // pred_region
          _
        $region16: #{tpu_custom_call.1} parent=11 // pred_fallthru
          _
      $region12: #{tpu_custom_call.1} parent=5 // pred_fallthru
        _
      %p183 = scmp.lt.s32.totalorder %s20, 2
      // Predicated region
      $region17: #{tpu_custom_call.1} parent=5 // pred_check
        %p184 = pneg %p183
      $region18: #{tpu_custom_call.1} parent=5 // pred_check_branch
        %186 = sbr.rel (%p184) target = $region20
      $region19: #{tpu_custom_call.1} parent=5 // pred_region
        // Predicated region
        $region21: #{tpu_custom_call.1} parent=19 // pred_check
          %p187 = pneg %p54
        $region22: #{tpu_custom_call.1} parent=19 // pred_check_branch
          %189 = sbr.rel (%p187) target = $region24
        $region23: #{tpu_custom_call.1} parent=19 // pred_region
          %s190 = sand.u32 %s44, 1
          %s191 = scalar_lea.sflag [#allocation3], %s190
          %s192 = sand.u32 %s44, 1
          %s193 = smul.addr %s192, 128
          %s194 = scalar_lea.vmem [#allocation2], %s193
          %s195 = smul.u32 2, %s28
          %s197 = ssub.s32 2048, 2048
          %198 = vsyncadd %s191, %s197
          %s199 = smul.addr %s27, 16
          %s200 = sadd.s32 %s195, %s199
          %s201 = smul.addr %s200, 128
          %s202 = scalar_lea.hbm %s0, %s201
          %s203 = sshll.u32 %s194, 4
          %s204 = int_to_ptr.vmem [resolvable:$true] %s203
          %209 = dma.hbm_to_vmem [thread:$0]  %s202, 2048, %s204, %s191, 256, 256, 16
        $region24: #{tpu_custom_call.1} parent=19 // pred_fallthru
          _
      $region20: #{tpu_custom_call.1} parent=5 // pred_fallthru
        _
      %p210 = scmp.le.s32.totalorder 1, %s20
      %p211 = scmp.lt.s32.totalorder %s20, 3
      %p212 = pnand %p210, %p211
      %p213 = pneg %p212
      // Predicated region
      $region25: #{tpu_custom_call.1} parent=5 // pred_check
        _
      $region26: #{tpu_custom_call.1} parent=5 // pred_check_branch
        %215 = sbr.rel (%p212) target = $region28
      $region27: #{tpu_custom_call.1} parent=5 // pred_region
        %s216 = ssub.s32 %s20, 1
        %s217 = sand.u32 %s47, 1
        %s218 = scalar_lea.sflag [#allocation3], %s217
        %s219 = sand.u32 %s47, 1
        %s220 = smul.addr %s219, 128
        %s221 = scalar_lea.vmem [#allocation2], %s220
        // Predicated region
        $region29: #{tpu_custom_call.1} parent=27 // pred_check
          %p222 = pneg %p60
        $region30: #{tpu_custom_call.1} parent=27 // pred_check_branch
          %224 = sbr.rel (%p222) target = $region32
        $region31: #{tpu_custom_call.1} parent=27 // pred_region
          %225 = dma.done %s218, 2048
        $region32: #{tpu_custom_call.1} parent=27 // pred_fallthru
          _
        %s226 = sand.u32 %s47, 1
        %s227 = scalar_lea.sflag [#allocation3], %s226
        %s228 = sand.u32 %s47, 1
        %s229 = smul.addr %s228, 128
        %s230 = scalar_lea.vmem [#allocation2], %s229
        %p231 = pneg %p60
        %p232 = pneg %p57
        %p233 = pneg %p81
        %p234 = pneg %p78
        %p235 = pneg %p109
        %p236 = pneg %p106
        %s237 = sand.u32 %s96, 1
        %s238 = scalar_lea.sflag [#allocation4], %s237
        %s239 = sand.u32 %s96, 1
        %s240 = smul.addr %s239, 64
        %s241 = scalar_lea.vmem [#allocation5], %s240
        %p242 = pneg %p137
        %p243 = pneg %p134
        %s244 = sand.u32 %s25, 1
        %s245 = scalar_lea.sflag [#allocation7], %s244
        %s246 = sand.u32 %s124, 1
        %s247 = smul.addr %s246, 64
        %s248 = scalar_lea.vmem [#allocation6], %s247
        %p249 = pneg %p165
        %p250 = pneg %p162
        %s251 = sand.u32 %s25, 1
        %s252 = scalar_lea.sflag [#allocation7], %s251
        %s253 = sand.u32 %s152, 1
        %s254 = smul.addr %s253, 64
        %s255 = scalar_lea.vmem [#allocation8], %s254
        %s256 = smul.u32 2, %s30
        %s257 = smul.u32 2, %s30
        %s258 = smul.u32 2, %s30
        %s259 = smul.u32 2, %s30
        %v261 = vld [vmem:[%s221] sm:$0xff]
        %v262 = vld [vmem:[%s221 + $0x8] sm:$0xff]
        %v263 = vld [vmem:[%s221 + $0x10] sm:$0xff]
        %v264 = vld [vmem:[%s221 + $0x18] sm:$0xff]
        %v265 = vld [vmem:[%s221 + $0x20] sm:$0xff]
        %v266 = vld [vmem:[%s221 + $0x28] sm:$0xff]
        %v267 = vld [vmem:[%s221 + $0x30] sm:$0xff]
        %v268 = vld [vmem:[%s221 + $0x38] sm:$0xff]
        %v269 = vld [vmem:[%s221 + $0x40] sm:$0xff]
        %v270 = vld [vmem:[%s221 + $0x48] sm:$0xff]
        %v271 = vld [vmem:[%s221 + $0x50] sm:$0xff]
        %v272 = vld [vmem:[%s221 + $0x58] sm:$0xff]
        %v273 = vld [vmem:[%s221 + $0x60] sm:$0xff]
        %v274 = vld [vmem:[%s221 + $0x68] sm:$0xff]
        %v275 = vld [vmem:[%s221 + $0x70] sm:$0xff]
        %v276 = vld [vmem:[%s221 + $0x78] sm:$0xff]
        %v277 = vpack.c.bf16 %v263, %v261
        %v278 = vpack.c.bf16 %v264, %v262
        %v279 = vpack.c.bf16 %v267, %v265
        %v280 = vpack.c.bf16 %v268, %v266
        %v281 = vpack.c.bf16 %v271, %v269
        %v282 = vpack.c.bf16 %v272, %v270
        %v283 = vpack.c.bf16 %v275, %v273
        %v284 = vpack.c.bf16 %v276, %v274
        %v285 = vld [vmem:[%s1] sm:$0xf]
        %v286 = vld [vmem:[%s1 + $0x4] sm:$0xf]
        %v287 = vld [vmem:[%s1 + $0x8] sm:$0xf]
        %v288 = vld [vmem:[%s1 + $0xc] sm:$0xf]
        %v289 = vld [vmem:[%s1 + $0x10] sm:$0xf]
        %v290 = vld [vmem:[%s1 + $0x14] sm:$0xf]
        %v291 = vld [vmem:[%s1 + $0x18] sm:$0xf]
        %v292 = vld [vmem:[%s1 + $0x1c] sm:$0xf]
        %v293 = vld [vmem:[%s1 + $0x20] sm:$0xf]
        %v294 = vld [vmem:[%s1 + $0x24] sm:$0xf]
        %v295 = vld [vmem:[%s1 + $0x28] sm:$0xf]
        %v296 = vld [vmem:[%s1 + $0x2c] sm:$0xf]
        %v297 = vld [vmem:[%s1 + $0x30] sm:$0xf]
        %v298 = vld [vmem:[%s1 + $0x34] sm:$0xf]
        %v299 = vld [vmem:[%s1 + $0x38] sm:$0xf]
        %v300 = vld [vmem:[%s1 + $0x3c] sm:$0xf]
        %v301 = vld [vmem:[%s1 + $0x40] sm:$0xf]
        %v302 = vld [vmem:[%s1 + $0x44] sm:$0xf]
        %v303 = vld [vmem:[%s1 + $0x48] sm:$0xf]
        %v304 = vld [vmem:[%s1 + $0x4c] sm:$0xf]
        %v305 = vld [vmem:[%s1 + $0x50] sm:$0xf]
        %v306 = vld [vmem:[%s1 + $0x54] sm:$0xf]
        %v307 = vld [vmem:[%s1 + $0x58] sm:$0xf]
        %v308 = vld [vmem:[%s1 + $0x5c] sm:$0xf]
        %v333 = vunpack.c.l.b16 %v285
        %v334 = vunpack.c.l.b16 %v286
        %v335 = vunpack.c.l.b16 %v287
        %v336 = vunpack.c.l.b16 %v288
        %v337 = vunpack.c.l.b16 %v289
        %v338 = vunpack.c.l.b16 %v290
        %v339 = vunpack.c.l.b16 %v291
        %v340 = vunpack.c.l.b16 %v292
        %v341 = vunpack.c.l.b16 %v293
        %v342 = vunpack.c.l.b16 %v294
        %v343 = vunpack.c.l.b16 %v295
        %v344 = vunpack.c.l.b16 %v296
        %v345 = vunpack.c.l.b16 %v297
        %v346 = vunpack.c.l.b16 %v298
        %v347 = vunpack.c.l.b16 %v299
        %v348 = vunpack.c.l.b16 %v300
        %v349 = vunpack.c.l.b16 %v301
        %v350 = vunpack.c.l.b16 %v302
        %v351 = vunpack.c.l.b16 %v303
        %v352 = vunpack.c.l.b16 %v304
        %v353 = vunpack.c.l.b16 %v305
        %v354 = vunpack.c.l.b16 %v306
        %v355 = vunpack.c.l.b16 %v307
        %v356 = vunpack.c.l.b16 %v308
        %v357 = vpack.c.b16 %v334, %v333
        %v358 = vpack.c.b16 %v336, %v335
        %v359 = vpack.c.b16 %v338, %v337
        %v360 = vpack.c.b16 %v340, %v339
        %v361 = vpack.c.b16 %v342, %v341
        %v362 = vpack.c.b16 %v344, %v343
        %v363 = vpack.c.b16 %v346, %v345
        %v364 = vpack.c.b16 %v348, %v347
        %v365 = vpack.c.b16 %v350, %v349
        %v366 = vpack.c.b16 %v352, %v351
        %v367 = vpack.c.b16 %v354, %v353
        %v368 = vpack.c.b16 %v356, %v355
        %vm369 = vcmask 523264
        %v371 = vsel %vm369, %v357, 0
        %v374 = vsel %vm369, %v358, 0
        %v377 = vsel %vm369, %v359, 0
        %v380 = vsel %vm369, %v360, 0
        %v383 = vsel %vm369, %v361, 0
        %v386 = vsel %vm369, %v362, 0
        %v389 = vsel %vm369, %v363, 0
        %v392 = vsel %vm369, %v364, 0
        %v395 = vsel %vm369, %v365, 0
        %v398 = vsel %vm369, %v366, 0
        %v401 = vsel %vm369, %v367, 0
        %v404 = vsel %vm369, %v368, 0
        %406 = vmatprep.subr.bf16.mxu0 %v278
        %407 = vmatpush1.bf16.msra.mxu0 %v277
        %408 = vmatprep.subr.bf16.mxu0 %v280
        %409 = vmatpush1.bf16.msra.mxu0 %v279
        %410 = vmatprep.subr.bf16.mxu0 %v282
        %411 = vmatpush1.bf16.msra.mxu0 %v281
        %412 = vmatprep.subr.bf16.mxu0 %v284
        %413 = vmatpush1.bf16.msra.mxu0 %v283
        %414 = vmatprep.subr.bf16.mxu0 0
        %415 = vmatpush1.bf16.msra.mxu0 0
        %416 = vmatprep.subr.bf16.mxu0 0
        %417 = vmatpush1.bf16.msra.mxu0 0
        %418 = vmatprep.subr.bf16.mxu0 0
        %419 = vmatpush1.bf16.msra.mxu0 0
        %420 = vmatprep.subr.bf16.mxu0 0
        %421 = vmatpush1.bf16.msra.mxu0 0
        %422 = vmatprep.subr.bf16.mxu0 0
        %423 = vmatpush1.bf16.msra.mxu0 0
        %424 = vmatprep.subr.bf16.mxu0 0
        %425 = vmatpush1.bf16.msra.mxu0 0
        %426 = vmatprep.subr.bf16.mxu0 0
        %427 = vmatpush1.bf16.msra.mxu0 0
        %428 = vmatprep.subr.bf16.mxu0 0
        %429 = vmatpush1.bf16.msra.mxu0 0
        %430 = vmatprep.subr.bf16.mxu0 0
        %431 = vmatpush1.bf16.msra.mxu0 0
        %432 = vmatprep.subr.bf16.mxu0 0
        %433 = vmatpush1.bf16.msra.mxu0 0
        %434 = vmatprep.subr.bf16.mxu0 0
        %435 = vmatpush1.bf16.msra.mxu0 0
        %436 = vmatprep.subr.bf16.mxu0 0
        %437 = vmatpush1.bf16.msra.mxu0 0
        %438 = vmatprep.mubr.bf16.mxu0 0
        %439 = vmatmul.mubr.bf16.gmra.mrb[0].mxu0 %v371
        %v440 = vpop.f32.mrb[0].mxu0
        %v441 = vadd.f32 0.0, %v440
        %v442 = vpop.f32.mrb[0].mxu0
        %v443 = vadd.f32 0.0, %v442
        %v444 = vpop.f32.mrb[0].mxu0
        %v445 = vadd.f32 0.0, %v444
        %v446 = vpop.f32.mrb[0].mxu0
        %v447 = vadd.f32 0.0, %v446
        %448 = vmatprep.mubr.bf16.mxu0 0
        %449 = vmatmul.mubr.bf16.gmra.mrb[0].mxu0 %v374
        %v450 = vpop.f32.mrb[0].mxu0
        %v451 = vadd.f32 0.0, %v450
        %v452 = vpop.f32.mrb[0].mxu0
        %v453 = vadd.f32 0.0, %v452
        %v454 = vpop.f32.mrb[0].mxu0
        %v455 = vadd.f32 0.0, %v454
        %v456 = vpop.f32.mrb[0].mxu0
        %v457 = vadd.f32 0.0, %v456
        %458 = vmatprep.mubr.bf16.mxu0 0
        %459 = vmatmul.mubr.bf16.gmra.mrb[0].mxu0 %v377
        %v460 = vpop.f32.mrb[0].mxu0
        %v461 = vadd.f32 0.0, %v460
        %v462 = vpop.f32.mrb[0].mxu0
        %v463 = vadd.f32 0.0, %v462
        %v464 = vpop.f32.mrb[0].mxu0
        %v465 = vadd.f32 0.0, %v464
        %v466 = vpop.f32.mrb[0].mxu0
        %v467 = vadd.f32 0.0, %v466
        %468 = vmatprep.mubr.bf16.mxu0 0
        %469 = vmatmul.mubr.bf16.gmra.mrb[0].mxu0 %v380
        %v470 = vpop.f32.mrb[0].mxu0
        %v471 = vadd.f32 0.0, %v470
        %v472 = vpop.f32.mrb[0].mxu0
        %v473 = vadd.f32 0.0, %v472
        %v474 = vpop.f32.mrb[0].mxu0
        %v475 = vadd.f32 0.0, %v474
        %v476 = vpop.f32.mrb[0].mxu0
        %v477 = vadd.f32 0.0, %v476
        %478 = vmatprep.mubr.bf16.mxu0 0
        %479 = vmatmul.mubr.bf16.gmra.mrb[0].mxu0 %v383
        %v480 = vpop.f32.mrb[0].mxu0
        %v481 = vadd.f32 0.0, %v480
        %v482 = vpop.f32.mrb[0].mxu0
        %v483 = vadd.f32 0.0, %v482
        %v484 = vpop.f32.mrb[0].mxu0
        %v485 = vadd.f32 0.0, %v484
        %v486 = vpop.f32.mrb[0].mxu0
        %v487 = vadd.f32 0.0, %v486
        %488 = vmatprep.mubr.bf16.mxu0 0
        %489 = vmatmul.mubr.bf16.gmra.mrb[0].mxu0 %v386
        %v490 = vpop.f32.mrb[0].mxu0
        %v491 = vadd.f32 0.0, %v490
        %v492 = vpop.f32.mrb[0].mxu0
        %v493 = vadd.f32 0.0, %v492
        %v494 = vpop.f32.mrb[0].mxu0
        %v495 = vadd.f32 0.0, %v494
        %v496 = vpop.f32.mrb[0].mxu0
        %v497 = vadd.f32 0.0, %v496
        %498 = vmatprep.mubr.bf16.mxu0 0
        %499 = vmatmul.mubr.bf16.gmra.mrb[0].mxu0 %v389
        %v500 = vpop.f32.mrb[0].mxu0
        %v501 = vadd.f32 0.0, %v500
        %v502 = vpop.f32.mrb[0].mxu0
        %v503 = vadd.f32 0.0, %v502
        %v504 = vpop.f32.mrb[0].mxu0
        %v505 = vadd.f32 0.0, %v504
        %v506 = vpop.f32.mrb[0].mxu0
        %v507 = vadd.f32 0.0, %v506
        %508 = vmatprep.mubr.bf16.mxu0 0
        %509 = vmatmul.mubr.bf16.gmra.mrb[0].mxu0 %v392
        %v510 = vpop.f32.mrb[0].mxu0
        %v511 = vadd.f32 0.0, %v510
        %v512 = vpop.f32.mrb[0].mxu0
        %v513 = vadd.f32 0.0, %v512
        %v514 = vpop.f32.mrb[0].mxu0
        %v515 = vadd.f32 0.0, %v514
        %v516 = vpop.f32.mrb[0].mxu0
        %v517 = vadd.f32 0.0, %v516
        %518 = vmatprep.mubr.bf16.mxu0 0
        %519 = vmatmul.mubr.bf16.gmra.mrb[0].mxu0 %v395
        %v520 = vpop.f32.mrb[0].mxu0
        %v521 = vadd.f32 0.0, %v520
        %v522 = vpop.f32.mrb[0].mxu0
        %v523 = vadd.f32 0.0, %v522
        %v524 = vpop.f32.mrb[0].mxu0
        %v525 = vadd.f32 0.0, %v524
        %v526 = vpop.f32.mrb[0].mxu0
        %v527 = vadd.f32 0.0, %v526
        %528 = vmatprep.mubr.bf16.mxu0 0
        %529 = vmatmul.mubr.bf16.gmra.mrb[0].mxu0 %v398
        %v530 = vpop.f32.mrb[0].mxu0
        %v531 = vadd.f32 0.0, %v530
        %v532 = vpop.f32.mrb[0].mxu0
        %v533 = vadd.f32 0.0, %v532
        %v534 = vpop.f32.mrb[0].mxu0
        %v535 = vadd.f32 0.0, %v534
        %v536 = vpop.f32.mrb[0].mxu0
        %v537 = vadd.f32 0.0, %v536
        %538 = vmatprep.mubr.bf16.mxu0 0
        %539 = vmatmul.mubr.bf16.gmra.mrb[0].mxu0 %v401
        %v540 = vpop.f32.mrb[0].mxu0
        %v541 = vadd.f32 0.0, %v540
        %v542 = vpop.f32.mrb[0].mxu0
        %v543 = vadd.f32 0.0, %v542
        %v544 = vpop.f32.mrb[0].mxu0
        %v545 = vadd.f32 0.0, %v544
        %v546 = vpop.f32.mrb[0].mxu0
        %v547 = vadd.f32 0.0, %v546
        %548 = vmatprep.mubr.bf16.mxu0 0
        %549 = vmatmul.mubr.bf16.gmra.mrb[0].mxu0 %v404
        %v550 = vpop.f32.mrb[0].mxu0
        %v551 = vadd.f32 0.0, %v550
        %v552 = vpop.f32.mrb[0].mxu0
        %v553 = vadd.f32 0.0, %v552
        %v554 = vpop.f32.mrb[0].mxu0
        %v555 = vadd.f32 0.0, %v554
        %v556 = vpop.f32.mrb[0].mxu0
        %v557 = vadd.f32 0.0, %v556
        %558 = vdwg.mxu0
        %v559 = vmul.f32 %v441, 0.35355338
        %v560 = vmul.f32 %v443, 0.35355338
        %v561 = vmul.f32 %v445, 0.35355338
        %v562 = vmul.f32 %v447, 0.35355338
        %v563 = vmul.f32 %v451, 0.35355338
        %v564 = vmul.f32 %v453, 0.35355338
        %v565 = vmul.f32 %v455, 0.35355338
        %v566 = vmul.f32 %v457, 0.35355338
        %v567 = vmul.f32 %v461, 0.35355338
        %v568 = vmul.f32 %v463, 0.35355338
        %v569 = vmul.f32 %v465, 0.35355338
        %v570 = vmul.f32 %v467, 0.35355338
        %v571 = vmul.f32 %v471, 0.35355338
        %v572 = vmul.f32 %v473, 0.35355338
        %v573 = vmul.f32 %v475, 0.35355338
        %v574 = vmul.f32 %v477, 0.35355338
        %v575 = vpack.c.bf16 %v559, %v559
        %v576 = vpack.c.bf16 %v560, %v560
        %v577 = vpack.c.bf16 %v561, %v561
        %v578 = vpack.c.bf16 %v562, %v562
        %v579 = vpack.c.bf16 %v563, %v563
        %v580 = vpack.c.bf16 %v564, %v564
        %v581 = vpack.c.bf16 %v565, %v565
        %v582 = vpack.c.bf16 %v566, %v566
        %v583 = vpack.c.bf16 %v567, %v567
        %v584 = vpack.c.bf16 %v568, %v568
        %v585 = vpack.c.bf16 %v569, %v569
        %v586 = vpack.c.bf16 %v570, %v570
        %v587 = vpack.c.bf16 %v571, %v571
        %v588 = vpack.c.bf16 %v572, %v572
        %v589 = vpack.c.bf16 %v573, %v573
        %v590 = vpack.c.bf16 %v574, %v574
        %v607 = vunpack.c.l.b16 %v575
        %v608 = vunpack.c.l.b16 %v576
        %v609 = vunpack.c.l.b16 %v577
        %v610 = vunpack.c.l.b16 %v578
        %v611 = vunpack.c.l.b16 %v579
        %v612 = vunpack.c.l.b16 %v580
        %v613 = vunpack.c.l.b16 %v581
        %v614 = vunpack.c.l.b16 %v582
        %v615 = vunpack.c.l.b16 %v583
        %v616 = vunpack.c.l.b16 %v584
        %v617 = vunpack.c.l.b16 %v585
        %v618 = vunpack.c.l.b16 %v586
        %v619 = vunpack.c.l.b16 %v587
        %v620 = vunpack.c.l.b16 %v588
        %v621 = vunpack.c.l.b16 %v589
        %v622 = vunpack.c.l.b16 %v590
        %v623 = vpack.c.b16 %v608, %v607
        %v624 = vpack.c.b16 %v610, %v609
        %v625 = vpack.c.b16 %v612, %v611
        %v626 = vpack.c.b16 %v614, %v613
        %v627 = vpack.c.b16 %v616, %v615
        %v628 = vpack.c.b16 %v618, %v617
        %v629 = vpack.c.b16 %v620, %v619
        %v630 = vpack.c.b16 %v622, %v621
        %639 = vst [vmem:[%s241] sm:$0xff] %v623
        %640 = vst [vmem:[%s241 + $0x8] sm:$0xff] %v624
        %641 = vst [vmem:[%s241 + $0x10] sm:$0xff] %v625
        %642 = vst [vmem:[%s241 + $0x18] sm:$0xff] %v626
        %643 = vst [vmem:[%s241 + $0x20] sm:$0xff] %v627
        %644 = vst [vmem:[%s241 + $0x28] sm:$0xff] %v628
        %645 = vst [vmem:[%s241 + $0x30] sm:$0xff] %v629
        %646 = vst [vmem:[%s241 + $0x38] sm:$0xff] %v630
        %v647 = vpack.c.bf16 %v481, %v481
        %v648 = vpack.c.bf16 %v483, %v483
        %v649 = vpack.c.bf16 %v485, %v485
        %v650 = vpack.c.bf16 %v487, %v487
        %v651 = vpack.c.bf16 %v491, %v491
        %v652 = vpack.c.bf16 %v493, %v493
        %v653 = vpack.c.bf16 %v495, %v495
        %v654 = vpack.c.bf16 %v497, %v497
        %v655 = vpack.c.bf16 %v501, %v501
        %v656 = vpack.c.bf16 %v503, %v503
        %v657 = vpack.c.bf16 %v505, %v505
        %v658 = vpack.c.bf16 %v507, %v507
        %v659 = vpack.c.bf16 %v511, %v511
        %v660 = vpack.c.bf16 %v513, %v513
        %v661 = vpack.c.bf16 %v515, %v515
        %v662 = vpack.c.bf16 %v517, %v517
        %v679 = vunpack.c.l.b16 %v647
        %v680 = vunpack.c.l.b16 %v648
        %v681 = vunpack.c.l.b16 %v649
        %v682 = vunpack.c.l.b16 %v650
        %v683 = vunpack.c.l.b16 %v651
        %v684 = vunpack.c.l.b16 %v652
        %v685 = vunpack.c.l.b16 %v653
        %v686 = vunpack.c.l.b16 %v654
        %v687 = vunpack.c.l.b16 %v655
        %v688 = vunpack.c.l.b16 %v656
        %v689 = vunpack.c.l.b16 %v657
        %v690 = vunpack.c.l.b16 %v658
        %v691 = vunpack.c.l.b16 %v659
        %v692 = vunpack.c.l.b16 %v660
        %v693 = vunpack.c.l.b16 %v661
        %v694 = vunpack.c.l.b16 %v662
        %v695 = vpack.c.b16 %v680, %v679
        %v696 = vpack.c.b16 %v682, %v681
        %v697 = vpack.c.b16 %v684, %v683
        %v698 = vpack.c.b16 %v686, %v685
        %v699 = vpack.c.b16 %v688, %v687
        %v700 = vpack.c.b16 %v690, %v689
        %v701 = vpack.c.b16 %v692, %v691
        %v702 = vpack.c.b16 %v694, %v693
        %711 = vst [vmem:[%s248] sm:$0xff] %v695
        %712 = vst [vmem:[%s248 + $0x8] sm:$0xff] %v696
        %713 = vst [vmem:[%s248 + $0x10] sm:$0xff] %v697
        %714 = vst [vmem:[%s248 + $0x18] sm:$0xff] %v698
        %715 = vst [vmem:[%s248 + $0x20] sm:$0xff] %v699
        %716 = vst [vmem:[%s248 + $0x28] sm:$0xff] %v700
        %717 = vst [vmem:[%s248 + $0x30] sm:$0xff] %v701
        %718 = vst [vmem:[%s248 + $0x38] sm:$0xff] %v702
        %v719 = vpack.c.bf16 %v521, %v521
        %v720 = vpack.c.bf16 %v523, %v523
        %v721 = vpack.c.bf16 %v525, %v525
        %v722 = vpack.c.bf16 %v527, %v527
        %v723 = vpack.c.bf16 %v531, %v531
        %v724 = vpack.c.bf16 %v533, %v533
        %v725 = vpack.c.bf16 %v535, %v535
        %v726 = vpack.c.bf16 %v537, %v537
        %v727 = vpack.c.bf16 %v541, %v541
        %v728 = vpack.c.bf16 %v543, %v543
        %v729 = vpack.c.bf16 %v545, %v545
        %v730 = vpack.c.bf16 %v547, %v547
        %v731 = vpack.c.bf16 %v551, %v551
        %v732 = vpack.c.bf16 %v553, %v553
        %v733 = vpack.c.bf16 %v555, %v555
        %v734 = vpack.c.bf16 %v557, %v557
        %v751 = vunpack.c.l.b16 %v719
        %v752 = vunpack.c.l.b16 %v720
        %v753 = vunpack.c.l.b16 %v721
        %v754 = vunpack.c.l.b16 %v722
        %v755 = vunpack.c.l.b16 %v723
        %v756 = vunpack.c.l.b16 %v724
        %v757 = vunpack.c.l.b16 %v725
        %v758 = vunpack.c.l.b16 %v726
        %v759 = vunpack.c.l.b16 %v727
        %v760 = vunpack.c.l.b16 %v728
        %v761 = vunpack.c.l.b16 %v729
        %v762 = vunpack.c.l.b16 %v730
        %v763 = vunpack.c.l.b16 %v731
        %v764 = vunpack.c.l.b16 %v732
        %v765 = vunpack.c.l.b16 %v733
        %v766 = vunpack.c.l.b16 %v734
        %v767 = vpack.c.b16 %v752, %v751
        %v768 = vpack.c.b16 %v754, %v753
        %v769 = vpack.c.b16 %v756, %v755
        %v770 = vpack.c.b16 %v758, %v757
        %v771 = vpack.c.b16 %v760, %v759
        %v772 = vpack.c.b16 %v762, %v761
        %v773 = vpack.c.b16 %v764, %v763
        %v774 = vpack.c.b16 %v766, %v765
        %783 = vst [vmem:[%s255] sm:$0xff] %v767
        %784 = vst [vmem:[%s255 + $0x8] sm:$0xff] %v768
        %785 = vst [vmem:[%s255 + $0x10] sm:$0xff] %v769
        %786 = vst [vmem:[%s255 + $0x18] sm:$0xff] %v770
        %787 = vst [vmem:[%s255 + $0x20] sm:$0xff] %v771
        %788 = vst [vmem:[%s255 + $0x28] sm:$0xff] %v772
        %789 = vst [vmem:[%s255 + $0x30] sm:$0xff] %v773
        %790 = vst [vmem:[%s255 + $0x38] sm:$0xff] %v774
        %s791 = sand.u32 %s96, 1
        %s792 = scalar_lea.sflag [#allocation4], %s791
        %s793 = sand.u32 %s96, 1
        %s794 = smul.addr %s793, 64
        %s795 = scalar_lea.vmem [#allocation5], %s794
        %s796 = sand.u32 %s25, 1
        %s797 = scalar_lea.sflag [#allocation7], %s796
        %s798 = sand.u32 %s124, 1
        %s799 = smul.addr %s798, 64
        %s800 = scalar_lea.vmem [#allocation6], %s799
        %s801 = sand.u32 %s25, 1
        %s802 = scalar_lea.sflag [#allocation7], %s801
        %s803 = sand.u32 %s152, 1
        %s804 = smul.addr %s803, 64
        %s805 = scalar_lea.vmem [#allocation8], %s804
        // Predicated region
        $region33: #{tpu_custom_call.1} parent=27 // pred_check
          %p806 = pneg %p106
        $region34: #{tpu_custom_call.1} parent=27 // pred_check_branch
          %808 = sbr.rel (%p806) target = $region36
        $region35: #{tpu_custom_call.1} parent=27 // pred_region
          %s809 = smul.u32 2, %s30
          %s811 = ssub.s32 1024, 1024
          %812 = vsyncadd %s792, %s811
          %s813 = smul.addr %s29, 16
          %s814 = sadd.s32 %s809, %s813
          %s815 = smul.addr %s814, 64
          %s816 = scalar_lea.hbm %s2, %s815
          %s817 = sshll.u32 %s795, 4
          %s818 = int_to_ptr.vmem [resolvable:$true] %s817
          %823 = dma.vmem_to_hbm [thread:$0]  %s818, 1024, %s816, %s792, 128, 128, 8
        $region36: #{tpu_custom_call.1} parent=27 // pred_fallthru
          _
        // Predicated region
        $region37: #{tpu_custom_call.1} parent=27 // pred_check
          %p824 = pneg %p134
        $region38: #{tpu_custom_call.1} parent=27 // pred_check_branch
          %826 = sbr.rel (%p824) target = $region40
        $region39: #{tpu_custom_call.1} parent=27 // pred_region
          %s827 = smul.u32 2, %s30
          %s829 = ssub.s32 1024, 1024
          %830 = vsyncadd %s797, %s829
          %s831 = smul.addr %s29, 16
          %s832 = sadd.s32 %s827, %s831
          %s833 = smul.addr %s832, 64
          %s834 = scalar_lea.hbm %s3, %s833
          %s835 = sshll.u32 %s800, 4
          %s836 = int_to_ptr.vmem [resolvable:$true] %s835
          %841 = dma.vmem_to_hbm [thread:$0]  %s836, 1024, %s834, %s797, 128, 128, 8
        $region40: #{tpu_custom_call.1} parent=27 // pred_fallthru
          _
        // Predicated region
        $region41: #{tpu_custom_call.1} parent=27 // pred_check
          %p842 = pneg %p162
        $region42: #{tpu_custom_call.1} parent=27 // pred_check_branch
          %844 = sbr.rel (%p842) target = $region44
        $region43: #{tpu_custom_call.1} parent=27 // pred_region
          %s845 = smul.u32 2, %s30
          %s847 = ssub.s32 1024, 1024
          %848 = vsyncadd %s802, %s847
          %s849 = smul.addr %s29, 16
          %s850 = sadd.s32 %s845, %s849
          %s851 = smul.addr %s850, 64
          %s852 = scalar_lea.hbm %s4, %s851
          %s853 = sshll.u32 %s805, 4
          %s854 = int_to_ptr.vmem [resolvable:$true] %s853
          %859 = dma.vmem_to_hbm [thread:$0]  %s854, 1024, %s852, %s802, 128, 128, 8
        $region44: #{tpu_custom_call.1} parent=27 // pred_fallthru
          _
      $region28: #{tpu_custom_call.1} parent=5 // pred_fallthru
        _
      %p860 = scmp.le.s32.totalorder 2, %s20
      // Predicated region
      $region45: #{tpu_custom_call.1} parent=5 // pred_check
        %p861 = pneg %p860
      $region46: #{tpu_custom_call.1} parent=5 // pred_check_branch
        %863 = sbr.rel (%p861) target = $region48
      $region47: #{tpu_custom_call.1} parent=5 // pred_region
        %s864 = ssub.s32 %s20, 2
        // Predicated region
        $region49: #{tpu_custom_call.1} parent=47 // pred_check
          %p865 = pneg %p112
        $region50: #{tpu_custom_call.1} parent=47 // pred_check_branch
          %867 = sbr.rel (%p865) target = $region52
        $region51: #{tpu_custom_call.1} parent=47 // pred_region
          %s868 = sand.u32 %s97, 1
          %s869 = scalar_lea.sflag [#allocation4], %s868
          %s870 = sand.u32 %s97, 1
          %s871 = smul.addr %s870, 64
          %s872 = scalar_lea.vmem [#allocation5], %s871
          %873 = dma.done %s869, 1024
        $region52: #{tpu_custom_call.1} parent=47 // pred_fallthru
          _
        // Predicated region
        $region53: #{tpu_custom_call.1} parent=47 // pred_check
          %p874 = pneg %p140
        $region54: #{tpu_custom_call.1} parent=47 // pred_check_branch
          %876 = sbr.rel (%p874) target = $region56
        $region55: #{tpu_custom_call.1} parent=47 // pred_region
          %s877 = sand.u32 %s26, 1
          %s878 = scalar_lea.sflag [#allocation7], %s877
          %s879 = sand.u32 %s125, 1
          %s880 = smul.addr %s879, 64
          %s881 = scalar_lea.vmem [#allocation6], %s880
          %882 = dma.done %s878, 1024
        $region56: #{tpu_custom_call.1} parent=47 // pred_fallthru
          _
        // Predicated region
        $region57: #{tpu_custom_call.1} parent=47 // pred_check
          %p883 = pneg %p168
        $region58: #{tpu_custom_call.1} parent=47 // pred_check_branch
          %885 = sbr.rel (%p883) target = $region60
        $region59: #{tpu_custom_call.1} parent=47 // pred_region
          %s886 = sand.u32 %s26, 1
          %s887 = scalar_lea.sflag [#allocation7], %s886
          %s888 = sand.u32 %s153, 1
          %s889 = smul.addr %s888, 64
          %s890 = scalar_lea.vmem [#allocation8], %s889
          %891 = dma.done %s887, 1024
        $region60: #{tpu_custom_call.1} parent=47 // pred_fallthru
          _
      $region48: #{tpu_custom_call.1} parent=5 // pred_fallthru
        _
    $region6: #{tpu_custom_call.1} parent=1 // loop_footer
      %s24 = sadd.s32 1, %s20
    $region7: #{tpu_custom_call.1} parent=1 // loop_footer_branch
      %19 = sbr.rel target = $region3
    $region8: #{tpu_custom_call.1} parent=1 // loop_exit
      _
    %892 = vsyncpa [#allocation3], 1
    %s893 = scalar_lea.sflag [#allocation3], 1
    %894 = vsyncpa %s893, 1
    %895 = vsyncpa [#allocation4], 1
    %s896 = scalar_lea.sflag [#allocation4], 1
    %897 = vsyncpa %s896, 1
    %898 = vsyncpa [#allocation7], 1
    %s899 = scalar_lea.sflag [#allocation7], 1
    %900 = vsyncpa %s899, 1

</llo_original>
